<compile_context>
chip_gen: v7x
topology: tpu7x:2x2x1
jax: 0.10.0
libtpu: 0.0.40
codegen_flags: <defaults>
</compile_context>

<pallas_src>
import jax
import jax.numpy as jnp
import numpy as np
from jax.experimental import pallas as pl
from jax.experimental.pallas import tpu as pltpu


# ---------------------------------------------------------------------------
# Kernels: per-row affine on lane-dense (ROW_TILE, TILE_HW) blocks.
# gamma/beta/shift are (ROW_TILE, 1) f32 columns broadcasting across lanes.
# ---------------------------------------------------------------------------
def _affine_kernel(x_ref, g_ref, b_ref, o_ref):
    # '+1' already folded into gamma in the wrapper.
    o_ref[...] = (g_ref[...] * x_ref[...] + b_ref[...]).astype(o_ref.dtype)


def _shift_kernel(x_ref, s_ref, o_ref):
    o_ref[...] = (x_ref[...] + s_ref[...]).astype(o_ref.dtype)


# ---------------------------------------------------------------------------
# Tiling helpers
# ---------------------------------------------------------------------------
def _round_up(a, m):
    return ((a + m - 1) // m) * m


def _sublane(itemsize):
    # Native sublane packing: 8 rows for 4-byte, 16 for 2-byte, 32 for 1-byte.
    return max(8, 32 // itemsize)


def _vmem_and_block_budget():
    """Generation-aware (vmem_limit_bytes, max_block_bytes)."""
    try:
        kind = jax.devices()[0].device_kind.lower()
    except Exception:
        kind = ""
    if ("v5" in kind) or ("v6" in kind):
        # 128 MiB physical VMEM -> roomy scoped limit.
        return 64 << 20, 4 << 20
    # v7x (64 MiB physical VMEM) or unknown: stay conservative.
    return 40 << 20, 4 << 20


def _choose_tiles(rows, hw_p, itemsize, max_block_bytes):
    """Pick (rows_padded, row_tile, tile_hw) for a (rows, hw_p) layout.

    Prefers full-HW blocks (contiguous HBM DMA) and grows the sublane dim to
    reach ~max_block_bytes; otherwise tiles HW in multiples of 128.
    """
    sub = _sublane(itemsize)
    rows_sub = _round_up(rows, sub)
    full_row_bytes = hw_p * itemsize

    if sub * full_row_bytes <= max_block_bytes:
        # Block spans the whole HW row -> contiguous DMA; grow the row count.
        tile_hw = hw_p
        max_rows = max(sub, (max_block_bytes // full_row_bytes) // sub * sub)
        row_tile = min(rows_sub, max_rows)
        rows_p = _round_up(rows_sub, row_tile)
    else:
        # Huge HW: keep minimal sublane rows and tile HW lane-dense.
        row_tile = sub
        rows_p = rows_sub
        cap = max(128, (max_block_bytes // (sub * itemsize)) // 128 * 128)
        tile_hw = min(hw_p, cap)
        while hw_p % tile_hw != 0:   # hw_p % 128 == 0 guarantees termination
            tile_hw -= 128
    return rows_p, row_tile, tile_hw


# ---------------------------------------------------------------------------
# Public wrapper
# ---------------------------------------------------------------------------
def feature_wise_affine(x, noise_embedding, weight, bias, *, affine,
                        force_pallas=False, small_bytes=512 * 1024):
    """x: (B, C, H, W); noise_embedding: (B, IN);
    weight: ((1+affine)*C, IN) (PyTorch Linear layout); bias: ((1+affine)*C,)."""
    B, C, H, W = x.shape
    OUTF = weight.shape[0]
    assert OUTF == (2 * C if affine else C)
    HW = H * W
    rows = B * C
    itemsize = x.dtype.itemsize

    # Hoisted Linear: one (B,IN)x(IN,OUTF) f32 matmul for the whole batch.
    step = (noise_embedding.astype(jnp.float32) @ weight.T.astype(jnp.float32)
            + bias.astype(jnp.float32))                      # (B, OUTF) f32

    if affine:
        gamma = step[:, :C] + 1.0        # fold the '+1' here (free in wrapper)
        beta = step[:, C:]
    else:
        shift = step

    # Small-problem fast path: Pallas launch + per-step overhead dominates
    # tiny stages; plain fused XLA wins on all generations.
    if not force_pallas and rows * HW * itemsize < small_bytes:
        if affine:
            out = gamma.reshape(B, C, 1, 1) * x + beta.reshape(B, C, 1, 1)
        else:
            out = x + shift.reshape(B, C, 1, 1)
        return out.astype(x.dtype)

    vmem_limit, max_block_bytes = _vmem_and_block_budget()
    hw_p = _round_up(HW, 128)            # lane-dense output, no masked stores
    rows_p, row_tile, tile_hw = _choose_tiles(rows, hw_p, itemsize,
                                              max_block_bytes)

    x_flat = x.reshape(rows, HW)
    pad_r, pad_hw = rows_p - rows, hw_p - HW
    if pad_r or pad_hw:
        x_flat = jnp.pad(x_flat, ((0, pad_r), (0, pad_hw)))

    def _col(v):                          # (B, C) f32 -> (rows_p, 1) f32
        v = v.reshape(rows, 1)
        if pad_r:
            v = jnp.pad(v, ((0, pad_r), (0, 0)))
        return v

    grid = (rows_p // row_tile, hw_p // tile_hw)
    x_spec = pl.BlockSpec((row_tile, tile_hw), lambda r, t: (r, t))
    vec_spec = pl.BlockSpec((row_tile, 1), lambda r, t: (r, 0))

    compiler_params = pltpu.CompilerParams(
        dimension_semantics=("parallel", "parallel"),
        vmem_limit_bytes=vmem_limit,
    )
    out_shape = jax.ShapeDtypeStruct((rows_p, hw_p), x.dtype)

    if affine:
        out_p = pl.pallas_call(
            _affine_kernel,
            out_shape=out_shape,
            grid_spec=pltpu.PrefetchScalarGridSpec(
                num_scalar_prefetch=0,
                grid=grid,
                in_specs=[x_spec, vec_spec, vec_spec],
                out_specs=x_spec,
            ),
            compiler_params=compiler_params,
        )(x_flat, _col(gamma), _col(beta))
    else:
        out_p = pl.pallas_call(
            _shift_kernel,
            out_shape=out_shape,
            grid_spec=pltpu.PrefetchScalarGridSpec(
                num_scalar_prefetch=0,
                grid=grid,
                in_specs=[x_spec, vec_spec],
                out_specs=x_spec,
            ),
            compiler_params=compiler_params,
        )(x_flat, _col(shift))

    return out_p[:rows, :HW].reshape(B, C, H, W)


# ---------------------------------------------------------------------------
# Pure-JAX reference (mirrors the PyTorch module)
# ---------------------------------------------------------------------------
def _reference(x, noise_embedding, weight, bias, *, affine):
    B = x.shape[0]
    step = noise_embedding @ weight.T + bias          # (B, (1+affine)*C)
    step = step.reshape(B, -1, 1, 1)
    if affine:
        gamma, beta = jnp.split(step, 2, axis=1)
        return (1.0 + gamma) * x + beta
    return x + step


if __name__ == "__main__":
    key = jax.random.PRNGKey(0)
    B, C, H, W = 2, 4, 16, 16
    IN = 32          # noise-embedding dim (Linear in_channels)
    OUT = C          # feature-wise modulated channels

    keys = jax.random.split(key, 7)
    x = jax.random.normal(keys[0], (B, C, H, W), dtype=jnp.float32)
    noise_emb = jax.random.normal(keys[1], (B, IN), dtype=jnp.float32)

    # PyTorch-style uniform(-1/sqrt(IN), 1/sqrt(IN)) Linear params.
    bound = 1.0 / np.sqrt(IN)
    w_aff = jax.random.uniform(keys[2], (2 * OUT, IN), minval=-bound, maxval=bound)
    b_aff = jax.random.uniform(keys[3], (2 * OUT,), minval=-bound, maxval=bound)
    w_shift = jax.random.uniform(keys[4], (OUT, IN), minval=-bound, maxval=bound)
    b_shift = jax.random.uniform(keys[5], (OUT,), minval=-bound, maxval=bound)

    # affine=True path, forced through the Pallas kernel.
    out_aff = jax.block_until_ready(
        feature_wise_affine(x, noise_emb, w_aff, b_aff, affine=True,
                            force_pallas=True))
    ref_aff = _reference(x, noise_emb, w_aff, b_aff, affine=True)
    np.testing.assert_allclose(np.asarray(out_aff), np.asarray(ref_aff),
                               rtol=1e-5, atol=1e-5)

    # affine=False path, forced through the Pallas kernel.
    out_shift = jax.block_until_ready(
        feature_wise_affine(x, noise_emb, w_shift, b_shift, affine=False,
                            force_pallas=True))
    ref_shift = _reference(x, noise_emb, w_shift, b_shift, affine=False)
    np.testing.assert_allclose(np.asarray(out_shift), np.asarray(ref_shift),
                               rtol=1e-5, atol=1e-5)

    # Non-128-multiple spatial size (exercise the HW-padding path).
    x_odd = jax.random.normal(keys[6], (B, C, 10, 10), dtype=jnp.float32)
    out_odd = jax.block_until_ready(
        feature_wise_affine(x_odd, noise_emb, w_aff, b_aff, affine=True,
                            force_pallas=True))
    ref_odd = _reference(x_odd, noise_emb, w_aff, b_aff, affine=True)
    np.testing.assert_allclose(np.asarray(out_odd), np.asarray(ref_odd),
                               rtol=1e-5, atol=1e-5)

    # Default dispatch at this tiny size takes the XLA fast path.
    out_fast = jax.block_until_ready(
        feature_wise_affine(x, noise_emb, w_aff, b_aff, affine=True))
    np.testing.assert_allclose(np.asarray(out_fast), np.asarray(ref_aff),
                               rtol=1e-5, atol=1e-5)

    print("KERNEL_OK")
</pallas_src>

<mosaic_0001>
module attributes {stable_mosaic.version = 11 : i64} {
  func.func @_affine_kernel(%arg0: i32, %arg1: i32, %arg2: memref<8x256xf32, #tpu.memory_space<vmem>>, %arg3: memref<8x1xf32, #tpu.memory_space<vmem>>, %arg4: memref<8x1xf32, #tpu.memory_space<vmem>>, %arg5: memref<8x256xf32, #tpu.memory_space<vmem>>) attributes {dimension_semantics = [#tpu.dimension_semantics<parallel>, #tpu.dimension_semantics<parallel>], iteration_bounds = array<i64: 1, 1>, scalar_prefetch = 0 : i64, scratch_operands = 0 : i64, tpu.core_type = #tpu.core_type<tc>, window_params = [{transform_indices = @transform_0, window_bounds = array<i64: 8, 256>}, {transform_indices = @transform_1, window_bounds = array<i64: 8, 1>}, {transform_indices = @transform_2, window_bounds = array<i64: 8, 1>}, {transform_indices = @transform_3, window_bounds = array<i64: 8, 256>}]} {
    %c0 = arith.constant 0 : index
    %c0_0 = arith.constant 0 : index
    %0 = vector.load %arg3[%c0, %c0_0] : memref<8x1xf32, #tpu.memory_space<vmem>>, vector<8x1xf32>
    %c0_1 = arith.constant 0 : index
    %c0_2 = arith.constant 0 : index
    %1 = vector.load %arg2[%c0_1, %c0_2] : memref<8x256xf32, #tpu.memory_space<vmem>>, vector<8x256xf32>
    %2 = vector.broadcast %0 : vector<8x1xf32> to vector<8x256xf32>
    %3 = arith.mulf %2, %1 : vector<8x256xf32>
    %c0_3 = arith.constant 0 : index
    %c0_4 = arith.constant 0 : index
    %4 = vector.load %arg4[%c0_3, %c0_4] : memref<8x1xf32, #tpu.memory_space<vmem>>, vector<8x1xf32>
    %5 = vector.broadcast %4 : vector<8x1xf32> to vector<8x256xf32>
    %6 = arith.addf %3, %5 : vector<8x256xf32>
    %c0_5 = arith.constant 0 : index
    %c0_6 = arith.constant 0 : index
    %7 = vector.load %arg5[%c0_5, %c0_6] : memref<8x256xf32, #tpu.memory_space<vmem>>, vector<8x256xf32>
    tpu.vector_store %arg5[%c0_5, %c0_6], %6 {strides = array<i32>} : memref<8x256xf32, #tpu.memory_space<vmem>>, vector<8x256xf32>,
    return
  }
  func.func @transform_0(%arg0: i32, %arg1: i32) -> (i32, i32) {
    %c0_i32 = arith.constant 0 : i32
    return %arg0, %arg1 : i32, i32
  }
  func.func @transform_1(%arg0: i32, %arg1: i32) -> (i32, i32) {
    %c0_i32 = arith.constant 0 : i32
    %c0_i32_0 = arith.constant 0 : i32
    return %arg0, %c0_i32 : i32, i32
  }
  func.func @transform_2(%arg0: i32, %arg1: i32) -> (i32, i32) {
    %c0_i32 = arith.constant 0 : i32
    %c0_i32_0 = arith.constant 0 : i32
    return %arg0, %c0_i32 : i32, i32
  }
  func.func @transform_3(%arg0: i32, %arg1: i32) -> (i32, i32) {
    %c0_i32 = arith.constant 0 : i32
    return %arg0, %arg1 : i32, i32
  }
}

</mosaic_0001>

<llo_original>
// kernel: tpu_custom_call.1
$region0: #{tpu_custom_call.1}
  #allocation0 [shape = 'u32[]', space=smem, size = 0x4, offset = 0x4, fixed_abs, tag = 'smem constant byte address 0x4 - core index']
  #allocation1 [shape = 'u32[144,128]{1,0:T(1,128)}', space=vmem, size = 0x12000, scoped, tag = 'internal scratch']
  %s0 = inlined_call_operand.vmem [shape: f32[8,256], index: 0, kind: input, shape index: {}]
  %s1 = inlined_call_operand.vmem [shape: f32[8,1], index: 1, kind: input, shape index: {}]
  %s2 = inlined_call_operand.vmem [shape: f32[8,1], index: 2, kind: input, shape index: {}]
  %s3 = inlined_call_operand.hbm [shape: f32[8,256], index: 3, kind: output, shape index: {}]
  %s4 = sld [smem:[#allocation0]]
  $region22: #{tpu_custom_call.1} parent=0
    _
  %s6 = ssub.s32 1, %s4
  %s7 = scalar_select 0, %s6, %s4
  $region1: #{tpu_custom_call.1} parent=0
    #allocation2 [shape = 'u8[8192]{0}', space=vmem, size = 0x2000, scoped, tag = 'output window, operand 0, single buffered']
    #allocation3 [shape = 's32[1]{0}', space=sflag, size = 0x4, scoped, tag = 'scoped memory for tpu_custom_call.1']
    %8 = vsyncpa [#allocation3], 0
    // Predicated region
    $region2: #{tpu_custom_call.1} parent=1 // pred_check
      _
    $region3: #{tpu_custom_call.1} parent=1 // pred_check_branch
      %10 = sbr.rel (0) target = $region5
    $region4: #{tpu_custom_call.1} parent=1 // pred_region
      _
    $region5: #{tpu_custom_call.1} parent=1 // pred_fallthru
      _
    // Predicated region
    $region6: #{tpu_custom_call.1} parent=1 // pred_check
      _
    $region7: #{tpu_custom_call.1} parent=1 // pred_check_branch
      %12 = sbr.rel (0) target = $region9
    $region8: #{tpu_custom_call.1} parent=1 // pred_region
      _
    $region9: #{tpu_custom_call.1} parent=1 // pred_fallthru
      _
    // Predicated region
    $region10: #{tpu_custom_call.1} parent=1 // pred_check
      _
    $region11: #{tpu_custom_call.1} parent=1 // pred_check_branch
      %14 = sbr.rel (0) target = $region13
    $region12: #{tpu_custom_call.1} parent=1 // pred_region
      _
    $region13: #{tpu_custom_call.1} parent=1 // pred_fallthru
      _
    %v15 = vld [vmem:[%s1] sm:$0xff]
    %v16 = vld [vmem:[%s0] sm:$0xff]
    %v17 = vld [vmem:[%s0 + $0x8] sm:$0xff]
    %19 = vset.pattern.permute.xlu0 0
    %20 = vperm.xlu0 %19, %v15
    %v21 = vpop.permute.xlu0 %20
    %v23 = vmul.f32 %v21, %v16
    %v24 = vmul.f32 %v21, %v17
    %v25 = vld [vmem:[%s2] sm:$0xff]
    %27 = vset.pattern.permute.xlu0 0
    %28 = vperm.xlu0 %27, %v25
    %v29 = vpop.permute.xlu0 %28
    %v31 = vadd.f32 %v23, %v29
    %v32 = vadd.f32 %v24, %v29
    %33 = vst [vmem:[#allocation2] sm:$0xff] %v31
    %34 = vst [vmem:[#allocation2 + $0x8] sm:$0xff] %v32
    // Predicated region
    $region14: #{tpu_custom_call.1} parent=1 // pred_check
      _
    $region15: #{tpu_custom_call.1} parent=1 // pred_check_branch
      %36 = sbr.rel (0) target = $region17
    $region16: #{tpu_custom_call.1} parent=1 // pred_region
      %s38 = ssub.s32 256, 256
      %39 = vsyncadd [#allocation3], %s38
      %s41 = sshll.u32 [#allocation2], 4
      %s42 = int_to_ptr.vmem [resolvable:$true] %s41
      %44 = dma.vmem_to_hbm [thread:$0]  %s42, 256, %s3, [#allocation3]
    $region17: #{tpu_custom_call.1} parent=1 // pred_fallthru
      _
    // Predicated region
    $region18: #{tpu_custom_call.1} parent=1 // pred_check
      _
    $region19: #{tpu_custom_call.1} parent=1 // pred_check_branch
      %46 = sbr.rel (0) target = $region21
    $region20: #{tpu_custom_call.1} parent=1 // pred_region
      %47 = dma.done [#allocation3], 256
    $region21: #{tpu_custom_call.1} parent=1 // pred_fallthru
      _
    %48 = vsyncpa [#allocation3], 1

</llo_original>
